<compile_context>
chip_gen: v6e
topology: v6e:2x2x1
jax: 0.10.0
libtpu: 0.0.40
codegen_flags: <defaults>
</compile_context>

<pallas_src>
import jax
import jax.numpy as jnp
from jax.experimental import pallas as pl
from jax.experimental.pallas import tpu as pltpu


def _modnet_kernel(inp_ref, quad_ref, eqp_ref,
                   w1a_ref, w1b_ref, b1_ref, w2_ref, b2_ref,
                   out_ref):
    """One grid step handles one batch tile of TB rows.

       Batch-invariant (computed once per tile):
         QA   = quad @ W1a + b1                 (Q, H)
         t    = quad @ eq_param; y = exp(-t^2)  (Q, 1);  ysum = sum(y)
       Per batch tile:
         XB   = inp_tile @ W1b                  (TB, H)
         Hact = tanh(QA[None] + XB[:, None, :]) (TB, Q, H)
         S    = sum_q y[q] * Hact[:, q, :]      (TB, H)  (y-weighted Q reduce)
         out  = S @ W2 + b2 * ysum              (TB, 1)
    """
    quad = quad_ref[...]                                                     # (Q, Dq)

    # ---- batch-invariant work (once per tile) ----
    qa = (jnp.dot(quad, w1a_ref[...], preferred_element_type=jnp.float32)
          + b1_ref[...])                                                     # (Q, H)
    t = jnp.dot(quad, eqp_ref[...], preferred_element_type=jnp.float32)      # (Q, 1)
    y = jnp.exp(-(t * t))                                                    # (Q, 1)
    ysum = jnp.sum(y)                                                        # scalar

    # ---- per-batch-tile work ----
    xb = jnp.dot(inp_ref[...], w1b_ref[...],
                 preferred_element_type=jnp.float32)                         # (TB, H)
    h = jnp.tanh(qa[None, :, :] + xb[:, None, :])                            # (TB, Q, H)

    # y-weighted reduction over the quadrature axis -> lane-dense (TB, H)
    s = jnp.sum(h * y[None, :, :], axis=1)                                   # (TB, H)

    out_ref[...] = (jnp.dot(s, w2_ref[...], preferred_element_type=jnp.float32)
                    + b2_ref[...] * ysum)                                    # (TB, 1)


def modnet_forward(inp, eq_param, quad_x, W1, b1, W2, b2, *, batch_tile=None):
    B, Din = inp.shape
    Q, Dq = quad_x.shape
    H = W1.shape[1]

    # Split the MLP's first layer to match the [quad_x | z] concatenation:
    # concat @ W1 == quad_x @ W1[:Dq] + z @ W1[Dq:]
    W1a = W1[:Dq]            # (Dq, H)
    W1b = W1[Dq:]            # (Din, H)
    b1r = b1.reshape(1, H)
    b2r = b2.reshape(1, 1)

    # One batch tile at small B (single grid step, all invariant work done once).
    # For larger B, tile by 8 (sublane multiple) so blocks stay (8,128)-legal and
    # the batch axis can be sharded across TensorCores ("parallel").
    if batch_tile is None:
        batch_tile = B if B <= 8 else 8
    TB = batch_tile
    num_tiles = pl.cdiv(B, TB)

    grid_spec = pltpu.PrefetchScalarGridSpec(
        num_scalar_prefetch=0,
        grid=(num_tiles,),
        in_specs=[
            pl.BlockSpec((TB, Din), lambda b: (b, 0)),    # per-tile input rows
            pl.BlockSpec((Q, Dq), lambda b: (0, 0)),      # quad_x (shared)
            pl.BlockSpec((Dq, 1), lambda b: (0, 0)),      # eq_param
            pl.BlockSpec((Dq, H), lambda b: (0, 0)),      # W1a
            pl.BlockSpec((Din, H), lambda b: (0, 0)),     # W1b
            pl.BlockSpec((1, H), lambda b: (0, 0)),       # b1
            pl.BlockSpec((H, 1), lambda b: (0, 0)),       # W2
            pl.BlockSpec((1, 1), lambda b: (0, 0)),       # b2
        ],
        out_specs=pl.BlockSpec((TB, 1), lambda b: (b, 0)),  # disjoint per-tile output
    )

    return pl.pallas_call(
        _modnet_kernel,
        out_shape=jax.ShapeDtypeStruct((B, 1), jnp.float32),
        grid_spec=grid_spec,
        compiler_params=pltpu.CompilerParams(
            dimension_semantics=("parallel",)),   # disjoint output blocks -> legal
    )(inp, quad_x, eq_param, W1a, W1b, b1r, W2, b2r)


def modnet_reference(inp, eq_param, quad_x, W1, b1, W2, b2):
    """Pure-JAX mirror of the PyTorch forward (tile / repeat / concat version)."""
    B, Din = inp.shape
    Q, Dq = quad_x.shape
    x = jnp.tile(quad_x, (B, 1))                           # quad_x.repeat(B, 1)
    t = x @ eq_param
    y = jnp.exp(-(t * t))                                  # r_func
    z = jnp.repeat(inp, Q, axis=0)                         # input.repeat(1, Q).reshape(...)
    concat = jnp.concatenate([x, z], axis=1)
    lhs = jnp.tanh(concat @ W1 + b1) @ W2 + b2             # mlp_x
    rhs = lhs * y
    return rhs.reshape(B, Q).sum(axis=1, keepdims=True)    # per-batch segment sums


if __name__ == "__main__":
    B, Din, Q, Dq, H = 2, 4, 16, 8, 32   # batch, input feat, quad points, quad feat, hidden

    key = jax.random.PRNGKey(0)
    k = jax.random.split(key, 7)
    inp = jax.random.normal(k[0], (B, Din), jnp.float32)
    quad_x = jax.random.normal(k[1], (Q, Dq), jnp.float32)
    eq_param = jax.random.normal(k[2], (Dq, 1), jnp.float32) / jnp.sqrt(Dq)
    W1 = jax.random.normal(k[3], (Dq + Din, H), jnp.float32) / jnp.sqrt(Dq + Din)
    b1 = jax.random.normal(k[4], (H,), jnp.float32) * 0.1
    W2 = jax.random.normal(k[5], (H, 1), jnp.float32) / jnp.sqrt(H)
    b2 = jax.random.normal(k[6], (1,), jnp.float32) * 0.1

    out = modnet_forward(inp, eq_param, quad_x, W1, b1, W2, b2)
    out = jax.block_until_ready(out)

    ref = modnet_reference(inp, eq_param, quad_x, W1, b1, W2, b2)
    assert out.shape == (B, 1), out.shape
    assert jnp.allclose(out, ref, rtol=1e-2, atol=1e-2), (out, ref)
    print("KERNEL_OK")
</pallas_src>

<mosaic_0001>
module attributes {stable_mosaic.version = 11 : i64} {
  func.func @_modnet_kernel(%arg0: i32, %arg1: memref<2x4xf32, #tpu.memory_space<vmem>>, %arg2: memref<16x8xf32, #tpu.memory_space<vmem>>, %arg3: memref<8x1xf32, #tpu.memory_space<vmem>>, %arg4: memref<8x32xf32, #tpu.memory_space<vmem>>, %arg5: memref<4x32xf32, #tpu.memory_space<vmem>>, %arg6: memref<1x32xf32, #tpu.memory_space<vmem>>, %arg7: memref<32x1xf32, #tpu.memory_space<vmem>>, %arg8: memref<1x1xf32, #tpu.memory_space<vmem>>, %arg9: memref<2x1xf32, #tpu.memory_space<vmem>>) attributes {dimension_semantics = [#tpu.dimension_semantics<parallel>], iteration_bounds = array<i64: 1>, scalar_prefetch = 0 : i64, scratch_operands = 0 : i64, tpu.core_type = #tpu.core_type<tc>, window_params = [{transform_indices = @transform_0, window_bounds = array<i64: 2, 4>}, {pipeline_mode = #tpu.pipeline_mode<synchronous>, transform_indices = @transform_1, window_bounds = array<i64: 16, 8>}, {pipeline_mode = #tpu.pipeline_mode<synchronous>, transform_indices = @transform_2, window_bounds = array<i64: 8, 1>}, {pipeline_mode = #tpu.pipeline_mode<synchronous>, transform_indices = @transform_3, window_bounds = array<i64: 8, 32>}, {pipeline_mode = #tpu.pipeline_mode<synchronous>, transform_indices = @transform_4, window_bounds = array<i64: 4, 32>}, {pipeline_mode = #tpu.pipeline_mode<synchronous>, transform_indices = @transform_5, window_bounds = array<i64: 1, 32>}, {pipeline_mode = #tpu.pipeline_mode<synchronous>, transform_indices = @transform_6, window_bounds = array<i64: 32, 1>}, {pipeline_mode = #tpu.pipeline_mode<synchronous>, transform_indices = @transform_7, window_bounds = array<i64: 1, 1>}, {transform_indices = @transform_8, window_bounds = array<i64: 2, 1>}]} {
    %c0 = arith.constant 0 : index
    %c0_0 = arith.constant 0 : index
    %0 = vector.load %arg2[%c0, %c0_0] : memref<16x8xf32, #tpu.memory_space<vmem>>, vector<16x8xf32>
    %c0_1 = arith.constant 0 : index
    %c0_2 = arith.constant 0 : index
    %1 = vector.load %arg4[%c0_1, %c0_2] : memref<8x32xf32, #tpu.memory_space<vmem>>, vector<8x32xf32>
    %cst = arith.constant dense<0.000000e+00> : vector<16x32xf32>
    %2 = tpu.matmul %0, %1, %cst {dimension_numbers = #tpu.dot_dimension_numbers<[1], [0], [0], [1], [0, 0, 1, 1], [], []>} : vector<16x8xf32>, vector<8x32xf32>, vector<16x32xf32> -> vector<16x32xf32>
    %c0_3 = arith.constant 0 : index
    %c0_4 = arith.constant 0 : index
    %3 = vector.load %arg6[%c0_3, %c0_4] : memref<1x32xf32, #tpu.memory_space<vmem>>, vector<1x32xf32>
    %4 = vector.broadcast %3 : vector<1x32xf32> to vector<16x32xf32>
    %5 = arith.addf %2, %4 : vector<16x32xf32>
    %c0_5 = arith.constant 0 : index
    %c0_6 = arith.constant 0 : index
    %6 = vector.load %arg3[%c0_5, %c0_6] : memref<8x1xf32, #tpu.memory_space<vmem>>, vector<8x1xf32>
    %cst_7 = arith.constant dense<0.000000e+00> : vector<16x1xf32>
    %7 = tpu.matmul %0, %6, %cst_7 {dimension_numbers = #tpu.dot_dimension_numbers<[1], [0], [0], [1], [0, 0, 1, 1], [], []>} : vector<16x8xf32>, vector<8x1xf32>, vector<16x1xf32> -> vector<16x1xf32>
    %8 = arith.mulf %7, %7 : vector<16x1xf32>
    %cst_8 = arith.constant 0.000000e+00 : f32
    %9 = vector.broadcast %cst_8 : f32 to vector<16x1xf32>
    %10 = arith.subf %9, %8 : vector<16x1xf32>
    %11 = math.exp %10 : vector<16x1xf32>
    %12 = vector.shape_cast %11 : vector<16x1xf32> to vector<1x16x1xf32>
    %cst_9 = arith.constant dense<0.000000e+00> : vector<1xf32>
    %13 = vector.multi_reduction <add>, %12, %cst_9 [1, 2] : vector<1x16x1xf32> to vector<1xf32>
    %14 = vector.shape_cast %13 : vector<1xf32> to vector<1x1x1xf32>
    %15 = vector.extract %14[0, 0, 0] : f32 from vector<1x1x1xf32>
    %c0_10 = arith.constant 0 : index
    %c0_11 = arith.constant 0 : index
    %16 = vector.load %arg1[%c0_10, %c0_11] : memref<2x4xf32, #tpu.memory_space<vmem>>, vector<2x4xf32>
    %c0_12 = arith.constant 0 : index
    %c0_13 = arith.constant 0 : index
    %17 = vector.load %arg5[%c0_12, %c0_13] : memref<4x32xf32, #tpu.memory_space<vmem>>, vector<4x32xf32>
    %cst_14 = arith.constant dense<0.000000e+00> : vector<2x32xf32>
    %18 = tpu.matmul %16, %17, %cst_14 {dimension_numbers = #tpu.dot_dimension_numbers<[1], [0], [0], [1], [0, 0, 1, 1], [], []>} : vector<2x4xf32>, vector<4x32xf32>, vector<2x32xf32> -> vector<2x32xf32>
    %19 = vector.shape_cast %5 : vector<16x32xf32> to vector<1x16x32xf32>
    %20 = vector.shape_cast %18 : vector<2x32xf32> to vector<2x1x32xf32>
    %21 = vector.broadcast %19 : vector<1x16x32xf32> to vector<2x16x32xf32>
    %22 = vector.broadcast %20 : vector<2x1x32xf32> to vector<2x16x32xf32>
    %23 = arith.addf %21, %22 : vector<2x16x32xf32>
    %24 = math.tanh %23 : vector<2x16x32xf32>
    %25 = vector.shape_cast %11 : vector<16x1xf32> to vector<1x16x1xf32>
    %26 = vector.broadcast %25 : vector<1x16x1xf32> to vector<2x16x32xf32>
    %27 = arith.mulf %24, %26 : vector<2x16x32xf32>
    %cst_15 = arith.constant dense<0.000000e+00> : vector<2x32xf32>
    %28 = vector.multi_reduction <add>, %27, %cst_15 [1] : vector<2x16x32xf32> to vector<2x32xf32>
    %c0_16 = arith.constant 0 : index
    %c0_17 = arith.constant 0 : index
    %29 = vector.load %arg7[%c0_16, %c0_17] : memref<32x1xf32, #tpu.memory_space<vmem>>, vector<32x1xf32>
    %cst_18 = arith.constant dense<0.000000e+00> : vector<2x1xf32>
    %30 = tpu.matmul %28, %29, %cst_18 {dimension_numbers = #tpu.dot_dimension_numbers<[1], [0], [0], [1], [0, 0, 1, 1], [], []>} : vector<2x32xf32>, vector<32x1xf32>, vector<2x1xf32> -> vector<2x1xf32>
    %c0_19 = arith.constant 0 : index
    %c0_20 = arith.constant 0 : index
    %31 = vector.load %arg8[%c0_19, %c0_20] : memref<1x1xf32, #tpu.memory_space<vmem>>, vector<1x1xf32>
    %32 = vector.broadcast %15 : f32 to vector<1x1xf32>
    %33 = arith.mulf %31, %32 : vector<1x1xf32>
    %34 = vector.broadcast %33 : vector<1x1xf32> to vector<2x1xf32>
    %35 = arith.addf %30, %34 : vector<2x1xf32>
    %c0_21 = arith.constant 0 : index
    %c0_22 = arith.constant 0 : index
    %36 = vector.load %arg9[%c0_21, %c0_22] : memref<2x1xf32, #tpu.memory_space<vmem>>, vector<2x1xf32>
    tpu.vector_store %arg9[%c0_21, %c0_22], %35 {strides = array<i32>} : memref<2x1xf32, #tpu.memory_space<vmem>>, vector<2x1xf32>,
    return
  }
  func.func @transform_0(%arg0: i32) -> (i32, i32) {
    %c0_i32 = arith.constant 0 : i32
    %c0_i32_0 = arith.constant 0 : i32
    return %arg0, %c0_i32 : i32, i32
  }
  func.func @transform_1(%arg0: i32) -> (i32, i32) {
    %c0_i32 = arith.constant 0 : i32
    %c0_i32_0 = arith.constant 0 : i32
    %c0_i32_1 = arith.constant 0 : i32
    return %c0_i32, %c0_i32_0 : i32, i32
  }
  func.func @transform_2(%arg0: i32) -> (i32, i32) {
    %c0_i32 = arith.constant 0 : i32
    %c0_i32_0 = arith.constant 0 : i32
    %c0_i32_1 = arith.constant 0 : i32
    return %c0_i32, %c0_i32_0 : i32, i32
  }
  func.func @transform_3(%arg0: i32) -> (i32, i32) {
    %c0_i32 = arith.constant 0 : i32
    %c0_i32_0 = arith.constant 0 : i32
    %c0_i32_1 = arith.constant 0 : i32
    return %c0_i32, %c0_i32_0 : i32, i32
  }
  func.func @transform_4(%arg0: i32) -> (i32, i32) {
    %c0_i32 = arith.constant 0 : i32
    %c0_i32_0 = arith.constant 0 : i32
    %c0_i32_1 = arith.constant 0 : i32
    return %c0_i32, %c0_i32_0 : i32, i32
  }
  func.func @transform_5(%arg0: i32) -> (i32, i32) {
    %c0_i32 = arith.constant 0 : i32
    %c0_i32_0 = arith.constant 0 : i32
    %c0_i32_1 = arith.constant 0 : i32
    return %c0_i32, %c0_i32_0 : i32, i32
  }
  func.func @transform_6(%arg0: i32) -> (i32, i32) {
    %c0_i32 = arith.constant 0 : i32
    %c0_i32_0 = arith.constant 0 : i32
    %c0_i32_1 = arith.constant 0 : i32
    return %c0_i32, %c0_i32_0 : i32, i32
  }
  func.func @transform_7(%arg0: i32) -> (i32, i32) {
    %c0_i32 = arith.constant 0 : i32
    %c0_i32_0 = arith.constant 0 : i32
    %c0_i32_1 = arith.constant 0 : i32
    return %c0_i32, %c0_i32_0 : i32, i32
  }
  func.func @transform_8(%arg0: i32) -> (i32, i32) {
    %c0_i32 = arith.constant 0 : i32
    %c0_i32_0 = arith.constant 0 : i32
    return %arg0, %c0_i32 : i32, i32
  }
}

</mosaic_0001>

<llo_original>
// kernel: tpu_custom_call.1
$region0: #{tpu_custom_call.1}
  #allocation0 [shape = 'u32[]', space=smem, size = 0x4, offset = 0x4, fixed_abs, tag = 'smem constant byte address 0x4 - core index']
  #allocation1 [shape = 'u32[144,128]{1,0:T(1,128)}', space=vmem, size = 0x12000, scoped, tag = 'internal scratch']
  #allocation2 [shape = 'f32[1,1]{1,0:T(1,128)S(1)}', space=vmem, size = 0x200, scoped, tag = 'scoped memory for tpu_custom_call.1']
  %s0 = inlined_call_operand.vmem [shape: f32[2,4], index: 0, kind: input, shape index: {}]
  %s1 = inlined_call_operand.vmem [shape: f32[16,8], index: 1, kind: input, shape index: {}]
  %s2 = inlined_call_operand.vmem [shape: f32[8,1], index: 2, kind: input, shape index: {}]
  %s3 = inlined_call_operand.vmem [shape: f32[8,32], index: 3, kind: input, shape index: {}]
  %s4 = inlined_call_operand.vmem [shape: f32[4,32], index: 4, kind: input, shape index: {}]
  %s5 = inlined_call_operand.vmem [shape: f32[1,32], index: 5, kind: input, shape index: {}]
  %s6 = inlined_call_operand.vmem [shape: f32[32,1], index: 6, kind: input, shape index: {}]
  %s7 = inlined_call_operand.<no memory space> [shape: f32[1,1], index: 7, kind: input, shape index: {}]
  %s8 = inlined_call_operand.vmem [shape: f32[2,1], index: 8, kind: output, shape index: {}]
  %s9 = sld [smem:[#allocation0]]
  $region42: #{tpu_custom_call.1} parent=0
    _
  %s11 = ssub.s32 1, %s9
  %s12 = scalar_select 0, %s11, %s9
  %v13 = vstv %s7
  %14 = vst [vmem:[#allocation2] sm:$0x1] %v13
  // Predicated region
  $region2: #{tpu_custom_call.1} parent=0 // pred_check
    _
  $region3: #{tpu_custom_call.1} parent=0 // pred_check_branch
    %16 = sbr.rel (0) target = $region5
  $region4: #{tpu_custom_call.1} parent=0 // pred_region
    _
  $region5: #{tpu_custom_call.1} parent=0 // pred_fallthru
    _
  // Predicated region
  $region6: #{tpu_custom_call.1} parent=0 // pred_check
    _
  $region7: #{tpu_custom_call.1} parent=0 // pred_check_branch
    %18 = sbr.rel (0) target = $region9
  $region8: #{tpu_custom_call.1} parent=0 // pred_region
    _
  $region9: #{tpu_custom_call.1} parent=0 // pred_fallthru
    _
  // Predicated region
  $region10: #{tpu_custom_call.1} parent=0 // pred_check
    _
  $region11: #{tpu_custom_call.1} parent=0 // pred_check_branch
    %20 = sbr.rel (0) target = $region13
  $region12: #{tpu_custom_call.1} parent=0 // pred_region
    _
  $region13: #{tpu_custom_call.1} parent=0 // pred_fallthru
    _
  // Predicated region
  $region14: #{tpu_custom_call.1} parent=0 // pred_check
    _
  $region15: #{tpu_custom_call.1} parent=0 // pred_check_branch
    %22 = sbr.rel (0) target = $region17
  $region16: #{tpu_custom_call.1} parent=0 // pred_region
    _
  $region17: #{tpu_custom_call.1} parent=0 // pred_fallthru
    _
  // Predicated region
  $region18: #{tpu_custom_call.1} parent=0 // pred_check
    _
  $region19: #{tpu_custom_call.1} parent=0 // pred_check_branch
    %24 = sbr.rel (0) target = $region21
  $region20: #{tpu_custom_call.1} parent=0 // pred_region
    _
  $region21: #{tpu_custom_call.1} parent=0 // pred_fallthru
    _
  // Predicated region
  $region22: #{tpu_custom_call.1} parent=0 // pred_check
    _
  $region23: #{tpu_custom_call.1} parent=0 // pred_check_branch
    %26 = sbr.rel (0) target = $region25
  $region24: #{tpu_custom_call.1} parent=0 // pred_region
    _
  $region25: #{tpu_custom_call.1} parent=0 // pred_fallthru
    _
  // Predicated region
  $region26: #{tpu_custom_call.1} parent=0 // pred_check
    _
  $region27: #{tpu_custom_call.1} parent=0 // pred_check_branch
    %28 = sbr.rel (0) target = $region29
  $region28: #{tpu_custom_call.1} parent=0 // pred_region
    _
  $region29: #{tpu_custom_call.1} parent=0 // pred_fallthru
    _
  // Predicated region
  $region30: #{tpu_custom_call.1} parent=0 // pred_check
    _
  $region31: #{tpu_custom_call.1} parent=0 // pred_check_branch
    %30 = sbr.rel (0) target = $region33
  $region32: #{tpu_custom_call.1} parent=0 // pred_region
    _
  $region33: #{tpu_custom_call.1} parent=0 // pred_fallthru
    _
  %v31 = vld [vmem:[%s1] sm:$0xff]
  %v32 = vld [vmem:[%s1 + $0x8] sm:$0xff]
  %v33 = vld [vmem:[%s3] sm:$0xff]
  %v34 = vld [vmem:[%s5] sm:$0x1]
  %v36 = vlaneseq
  %v37 = vshrl.u32 %v36, 7
  %v38 = vsub.s32 0, %v37
  %v39 = vrot.slane %v34, %v38
  %vm41 = vcmask 64512
  %v43 = vsel %vm41, %v31, 0
  %v46 = vsel %vm41, %v32, 0
  %48 = vmatprep.subr.mxu0 0.0
  %49 = vmatpush1.msra.mxu0 0.0
  %50 = vmatprep.subr.mxu0 0.0
  %51 = vmatpush1.msra.mxu0 0.0
  %52 = vmatprep.subr.mxu0 0.0
  %53 = vmatpush1.msra.mxu0 0.0
  %54 = vmatprep.subr.mxu0 0.0
  %55 = vmatpush1.msra.mxu0 0.0
  %56 = vmatprep.subr.mxu0 0.0
  %57 = vmatpush1.msra.mxu0 0.0
  %58 = vmatprep.subr.mxu0 0.0
  %59 = vmatpush1.msra.mxu0 0.0
  %60 = vmatprep.subr.mxu0 0.0
  %61 = vmatpush1.msra.mxu0 0.0
  %62 = vmatprep.subr.mxu0 0.0
  %63 = vmatpush1.msra.mxu0 0.0
  %64 = vmatprep.subr.mxu0 0.0
  %65 = vmatpush1.msra.mxu0 0.0
  %66 = vmatprep.subr.mxu0 0.0
  %67 = vmatpush1.msra.mxu0 0.0
  %68 = vmatprep.subr.mxu0 0.0
  %69 = vmatpush1.msra.mxu0 0.0
  %70 = vmatprep.subr.mxu0 0.0
  %71 = vmatpush1.msra.mxu0 0.0
  %72 = vmatprep.subr.mxu0 0.0
  %73 = vmatpush1.msra.mxu0 0.0
  %74 = vmatprep.subr.mxu0 0.0
  %75 = vmatpush1.msra.mxu0 0.0
  %76 = vmatprep.subr.mxu0 0.0
  %77 = vmatpush1.msra.mxu0 0.0
  %78 = vmatprep.subr.mxu0 0.0
  %79 = vmatpush1.msra.mxu0 %v33
  %80 = vmatprep.subr.mxu0 0.0
  %81 = vmatpush2.msra.mxu0 0.0
  %82 = vmatprep.subr.mxu0 0.0
  %83 = vmatpush2.msra.mxu0 0.0
  %84 = vmatprep.subr.mxu0 0.0
  %85 = vmatpush2.msra.mxu0 0.0
  %86 = vmatprep.subr.mxu0 0.0
  %87 = vmatpush2.msra.mxu0 0.0
  %88 = vmatprep.subr.mxu0 0.0
  %89 = vmatpush2.msra.mxu0 0.0
  %90 = vmatprep.subr.mxu0 0.0
  %91 = vmatpush2.msra.mxu0 0.0
  %92 = vmatprep.subr.mxu0 0.0
  %93 = vmatpush2.msra.mxu0 0.0
  %94 = vmatprep.subr.mxu0 0.0
  %95 = vmatpush2.msra.mxu0 0.0
  %96 = vmatprep.subr.mxu0 0.0
  %97 = vmatpush2.msra.mxu0 0.0
  %98 = vmatprep.subr.mxu0 0.0
  %99 = vmatpush2.msra.mxu0 0.0
  %100 = vmatprep.subr.mxu0 0.0
  %101 = vmatpush2.msra.mxu0 0.0
  %102 = vmatprep.subr.mxu0 0.0
  %103 = vmatpush2.msra.mxu0 0.0
  %104 = vmatprep.subr.mxu0 0.0
  %105 = vmatpush2.msra.mxu0 0.0
  %106 = vmatprep.subr.mxu0 0.0
  %107 = vmatpush2.msra.mxu0 0.0
  %108 = vmatprep.subr.mxu0 0.0
  %109 = vmatpush2.msra.mxu0 0.0
  %110 = vmatprep.subr.mxu0 0.0
  %111 = vmatpush2.msra.mxu0 0.0
  %112 = vmatprep.mubr.f32.mxu0 0.0
  %113 = vmatmul.mubr.f32.gmra.mxu0 %v43
  %v114 = vpop.f32.mrf.mxu0
  %v115 = vadd.f32 %v39, %v114
  %v116 = vpop.f32.mrf.mxu0
  %117 = vmatprep.mubr.f32.mxu0 0.0
  %118 = vmatmul.mubr.f32.gmra.mxu0 %v46
  %v119 = vpop.f32.mrf.mxu0
  %v120 = vadd.f32 %v39, %v119
  %v121 = vpop.f32.mrf.mxu0
  %122 = vdwg.mxu0
  %v123 = vld [vmem:[%s2] sm:$0xff]
  %124 = vmatprep.subr.mxu0 0.0
  %125 = vmatpush1.msra.mxu0 0.0
  %126 = vmatprep.subr.mxu0 0.0
  %127 = vmatpush1.msra.mxu0 0.0
  %128 = vmatprep.subr.mxu0 0.0
  %129 = vmatpush1.msra.mxu0 0.0
  %130 = vmatprep.subr.mxu0 0.0
  %131 = vmatpush1.msra.mxu0 0.0
  %132 = vmatprep.subr.mxu0 0.0
  %133 = vmatpush1.msra.mxu0 0.0
  %134 = vmatprep.subr.mxu0 0.0
  %135 = vmatpush1.msra.mxu0 0.0
  %136 = vmatprep.subr.mxu0 0.0
  %137 = vmatpush1.msra.mxu0 0.0
  %138 = vmatprep.subr.mxu0 0.0
  %139 = vmatpush1.msra.mxu0 0.0
  %140 = vmatprep.subr.mxu0 0.0
  %141 = vmatpush1.msra.mxu0 0.0
  %142 = vmatprep.subr.mxu0 0.0
  %143 = vmatpush1.msra.mxu0 0.0
  %144 = vmatprep.subr.mxu0 0.0
  %145 = vmatpush1.msra.mxu0 0.0
  %146 = vmatprep.subr.mxu0 0.0
  %147 = vmatpush1.msra.mxu0 0.0
  %148 = vmatprep.subr.mxu0 0.0
  %149 = vmatpush1.msra.mxu0 0.0
  %150 = vmatprep.subr.mxu0 0.0
  %151 = vmatpush1.msra.mxu0 0.0
  %152 = vmatprep.subr.mxu0 0.0
  %153 = vmatpush1.msra.mxu0 0.0
  %154 = vmatprep.subr.mxu0 0.0
  %155 = vmatpush1.msra.mxu0 %v123
  %156 = vmatprep.subr.mxu0 0.0
  %157 = vmatpush2.msra.mxu0 0.0
  %158 = vmatprep.subr.mxu0 0.0
  %159 = vmatpush2.msra.mxu0 0.0
  %160 = vmatprep.subr.mxu0 0.0
  %161 = vmatpush2.msra.mxu0 0.0
  %162 = vmatprep.subr.mxu0 0.0
  %163 = vmatpush2.msra.mxu0 0.0
  %164 = vmatprep.subr.mxu0 0.0
  %165 = vmatpush2.msra.mxu0 0.0
  %166 = vmatprep.subr.mxu0 0.0
  %167 = vmatpush2.msra.mxu0 0.0
  %168 = vmatprep.subr.mxu0 0.0
  %169 = vmatpush2.msra.mxu0 0.0
  %170 = vmatprep.subr.mxu0 0.0
  %171 = vmatpush2.msra.mxu0 0.0
  %172 = vmatprep.subr.mxu0 0.0
  %173 = vmatpush2.msra.mxu0 0.0
  %174 = vmatprep.subr.mxu0 0.0
  %175 = vmatpush2.msra.mxu0 0.0
  %176 = vmatprep.subr.mxu0 0.0
  %177 = vmatpush2.msra.mxu0 0.0
  %178 = vmatprep.subr.mxu0 0.0
  %179 = vmatpush2.msra.mxu0 0.0
  %180 = vmatprep.subr.mxu0 0.0
  %181 = vmatpush2.msra.mxu0 0.0
  %182 = vmatprep.subr.mxu0 0.0
  %183 = vmatpush2.msra.mxu0 0.0
  %184 = vmatprep.subr.mxu0 0.0
  %185 = vmatpush2.msra.mxu0 0.0
  %186 = vmatprep.subr.mxu0 0.0
  %187 = vmatpush2.msra.mxu0 0.0
  %188 = vmatprep.mubr.f32.mxu0 0.0
  %189 = vmatmul.mubr.f32.gmra.mxu0 %v43
  %v190 = vpop.f32.mrf.mxu0
  %v191 = vadd.f32 0.0, %v190
  %v192 = vpop.f32.mrf.mxu0
  %193 = vmatprep.mubr.f32.mxu0 0.0
  %194 = vmatmul.mubr.f32.gmra.mxu0 %v46
  %v195 = vpop.f32.mrf.mxu0
  %v196 = vadd.f32 0.0, %v195
  %v197 = vpop.f32.mrf.mxu0
  %198 = vdwg.mxu0
  %v199 = vmul.f32 %v191, %v191
  %v200 = vmul.f32 %v196, %v196
  %v201 = vsub.f32 0.0, %v199
  %v202 = vsub.f32 0.0, %v200
  %v203 = vmul.f32 %v201, 1.442695
  %v204 = vpow.pop %v203
  %v205 = vmul.f32 %v202, 1.442695
  %v206 = vpow.pop %v205
  %vm207 = vcmask 7168
  %v208 = vsel %vm207, %v204, 0.0
  %v209 = vsel %vm207, %v206, 0.0
  %v210 = vadd.f32 %v208, %v209
  %211 = vadd.xlane.f32.xlu0 %v210
  %v212 = vpop.xlane.xlu0 %211
  %v213 = vrot.slane %v212, 4
  %v214 = vadd.f32 %v212, %v213
  %v215 = vrot.slane %v214, 2
  %v216 = vadd.f32 %v214, %v215
  %v217 = vrot.slane %v216, 1
  %v218 = vadd.f32 %v216, %v217
  %s219 = vtos %v218
  %v220 = vld [vmem:[%s0] sm:$0x3]
  %v221 = vld [vmem:[%s4] sm:$0xf]
  %vm222 = vcmask 31744
  %v224 = vsel %vm222, %v220, 0
  %vm226 = vcmask 1043456
  %v228 = vsel %vm226, %v221, 0
  %230 = vmatprep.subr.mxu0 0.0
  %231 = vmatpush1.msra.mxu0 0.0
  %232 = vmatprep.subr.mxu0 0.0
  %233 = vmatpush1.msra.mxu0 0.0
  %234 = vmatprep.subr.mxu0 0.0
  %235 = vmatpush1.msra.mxu0 0.0
  %236 = vmatprep.subr.mxu0 0.0
  %237 = vmatpush1.msra.mxu0 0.0
  %238 = vmatprep.subr.mxu0 0.0
  %239 = vmatpush1.msra.mxu0 0.0
  %240 = vmatprep.subr.mxu0 0.0
  %241 = vmatpush1.msra.mxu0 0.0
  %242 = vmatprep.subr.mxu0 0.0
  %243 = vmatpush1.msra.mxu0 0.0
  %244 = vmatprep.subr.mxu0 0.0
  %245 = vmatpush1.msra.mxu0 0.0
  %246 = vmatprep.subr.mxu0 0.0
  %247 = vmatpush1.msra.mxu0 0.0
  %248 = vmatprep.subr.mxu0 0.0
  %249 = vmatpush1.msra.mxu0 0.0
  %250 = vmatprep.subr.mxu0 0.0
  %251 = vmatpush1.msra.mxu0 0.0
  %252 = vmatprep.subr.mxu0 0.0
  %253 = vmatpush1.msra.mxu0 0.0
  %254 = vmatprep.subr.mxu0 0.0
  %255 = vmatpush1.msra.mxu0 0.0
  %256 = vmatprep.subr.mxu0 0.0
  %257 = vmatpush1.msra.mxu0 0.0
  %258 = vmatprep.subr.mxu0 0.0
  %259 = vmatpush1.msra.mxu0 0.0
  %260 = vmatprep.subr.mxu0 0.0
  %261 = vmatpush1.msra.mxu0 %v228
  %262 = vmatprep.subr.mxu0 0.0
  %263 = vmatpush2.msra.mxu0 0.0
  %264 = vmatprep.subr.mxu0 0.0
  %265 = vmatpush2.msra.mxu0 0.0
  %266 = vmatprep.subr.mxu0 0.0
  %267 = vmatpush2.msra.mxu0 0.0
  %268 = vmatprep.subr.mxu0 0.0
  %269 = vmatpush2.msra.mxu0 0.0
  %270 = vmatprep.subr.mxu0 0.0
  %271 = vmatpush2.msra.mxu0 0.0
  %272 = vmatprep.subr.mxu0 0.0
  %273 = vmatpush2.msra.mxu0 0.0
  %274 = vmatprep.subr.mxu0 0.0
  %275 = vmatpush2.msra.mxu0 0.0
  %276 = vmatprep.subr.mxu0 0.0
  %277 = vmatpush2.msra.mxu0 0.0
  %278 = vmatprep.subr.mxu0 0.0
  %279 = vmatpush2.msra.mxu0 0.0
  %280 = vmatprep.subr.mxu0 0.0
  %281 = vmatpush2.msra.mxu0 0.0
  %282 = vmatprep.subr.mxu0 0.0
  %283 = vmatpush2.msra.mxu0 0.0
  %284 = vmatprep.subr.mxu0 0.0
  %285 = vmatpush2.msra.mxu0 0.0
  %286 = vmatprep.subr.mxu0 0.0
  %287 = vmatpush2.msra.mxu0 0.0
  %288 = vmatprep.subr.mxu0 0.0
  %289 = vmatpush2.msra.mxu0 0.0
  %290 = vmatprep.subr.mxu0 0.0
  %291 = vmatpush2.msra.mxu0 0.0
  %292 = vmatprep.subr.mxu0 0.0
  %293 = vmatpush2.msra.mxu0 0.0
  %294 = vmatprep.mubr.f32.mxu0 0.0
  %295 = vmatmul.mubr.f32.gmra.mxu0 %v224
  %v296 = vpop.f32.mrf.mxu0
  %v297 = vadd.f32 0.0, %v296
  %v298 = vpop.f32.mrf.mxu0
  %299 = vdwg.mxu0
  %v302 = vunpack.c.l.s4 1966171168
  %v303 = vunpack.c.0.s8 %v302
  %v304 = vlaneseq
  %v305 = vshrl.u32 %v304, 7
  %v306 = vsub.s32 %v303, %v305
  %v307 = vrot.slane %v297, %v306
  %v308 = vcombine.high %v307, %v307
  %v310 = vunpack.c.l.s4 1966171168
  %v311 = vunpack.c.0.s8 %v310
  %v312 = vlaneseq
  %v313 = vshrl.u32 %v312, 7
  %v314 = vsub.s32 %v311, %v313
  %v315 = vrot.slane %v307, %v314
  %v317 = vunpack.c.l.s4 1966171168
  %v318 = vunpack.c.0.s8 %v317
  %v319 = vlaneseq
  %v320 = vshrl.u32 %v319, 7
  %v321 = vsub.s32 %v318, %v320
  %v322 = vrot.slane %v308, %v321
  %v323 = vlaneseq
  %v324 = vshrl.u32 %v323, 7
  %v325 = vsub.s32 0, %v324
  %v326 = vrot.slane %v315, %v325
  %v327 = vlaneseq
  %v328 = vshrl.u32 %v327, 7
  %v329 = vsub.s32 0, %v328
  %v330 = vrot.slane %v322, %v329
  %v333 = vadd.f32 %v115, %v326
  %v334 = vadd.f32 %v120, %v326
  %v335 = vadd.f32 %v115, %v330
  %v336 = vadd.f32 %v120, %v330
  %v337 = vtanh.pop %v333
  %v338 = vtanh.pop %v334
  %v339 = vtanh.pop %v335
  %v340 = vtanh.pop %v336
  %342 = vset.pattern.permute.xlu0 0
  %343 = vperm.xlu0 %342, %v204
  %v344 = vpop.permute.xlu0 %343
  %347 = vset.pattern.permute.xlu0 0
  %348 = vperm.xlu0 %347, %v206
  %v349 = vpop.permute.xlu0 %348
  %v351 = vmul.f32 %v337, %v344
  %v352 = vmul.f32 %v338, %v349
  %v353 = vmul.f32 %v339, %v344
  %v354 = vmul.f32 %v340, %v349
  %vm355 = vcmask 261120
  %v356 = vsel %vm355, %v351, 0.0
  %v357 = vsel %vm355, %v352, 0.0
  %v358 = vadd.f32 %v356, %v357
  %v359 = vrot.slane %v358, 4
  %v360 = vadd.f32 %v358, %v359
  %v361 = vrot.slane %v360, 2
  %v362 = vadd.f32 %v360, %v361
  %v363 = vrot.slane %v362, 1
  %v364 = vadd.f32 %v362, %v363
  %v365 = vsel %vm355, %v353, 0.0
  %v366 = vsel %vm355, %v354, 0.0
  %v367 = vadd.f32 %v365, %v366
  %v368 = vrot.slane %v367, 4
  %v369 = vadd.f32 %v367, %v368
  %v370 = vrot.slane %v369, 2
  %v371 = vadd.f32 %v369, %v370
  %v372 = vrot.slane %v371, 1
  %v373 = vadd.f32 %v371, %v372
  %v374 = vld [vmem:[%s6] sm:$0xff]
  %v375 = vld [vmem:[%s6 + $0x8] sm:$0xff]
  %v376 = vld [vmem:[%s6 + $0x10] sm:$0xff]
  %v377 = vld [vmem:[%s6 + $0x18] sm:$0xff]
  %v378 = vld [vmem:[#allocation2] sm:$0x1]
  %v379 = vstv %s219
  %v380 = vmul.f32 %v378, %v379
  %v382 = vlaneseq
  %v383 = vshrl.u32 %v382, 7
  %v384 = vsub.s32 0, %v383
  %v385 = vrot.slane %v380, %v384
  %vm389 = vcmask 1041409
  %v390 = vsel %vm389, %v373, %v364
  %v391 = vsel %vm355, %v390, 0
  %393 = vmatprep.subr.mxu0 0.0
  %394 = vmatpush1.msra.mxu0 0.0
  %395 = vmatprep.subr.mxu0 0.0
  %396 = vmatpush1.msra.mxu0 0.0
  %397 = vmatprep.subr.mxu0 0.0
  %398 = vmatpush1.msra.mxu0 0.0
  %399 = vmatprep.subr.mxu0 0.0
  %400 = vmatpush1.msra.mxu0 0.0
  %401 = vmatprep.subr.mxu0 0.0
  %402 = vmatpush1.msra.mxu0 0.0
  %403 = vmatprep.subr.mxu0 0.0
  %404 = vmatpush1.msra.mxu0 0.0
  %405 = vmatprep.subr.mxu0 0.0
  %406 = vmatpush1.msra.mxu0 0.0
  %407 = vmatprep.subr.mxu0 0.0
  %408 = vmatpush1.msra.mxu0 0.0
  %409 = vmatprep.subr.mxu0 0.0
  %410 = vmatpush1.msra.mxu0 0.0
  %411 = vmatprep.subr.mxu0 0.0
  %412 = vmatpush1.msra.mxu0 0.0
  %413 = vmatprep.subr.mxu0 0.0
  %414 = vmatpush1.msra.mxu0 0.0
  %415 = vmatprep.subr.mxu0 0.0
  %416 = vmatpush1.msra.mxu0 0.0
  %417 = vmatprep.subr.mxu0 0.0
  %418 = vmatpush1.msra.mxu0 %v377
  %419 = vmatprep.subr.mxu0 0.0
  %420 = vmatpush1.msra.mxu0 %v376
  %421 = vmatprep.subr.mxu0 0.0
  %422 = vmatpush1.msra.mxu0 %v375
  %423 = vmatprep.subr.mxu0 0.0
  %424 = vmatpush1.msra.mxu0 %v374
  %425 = vmatprep.subr.mxu0 0.0
  %426 = vmatpush2.msra.mxu0 0.0
  %427 = vmatprep.subr.mxu0 0.0
  %428 = vmatpush2.msra.mxu0 0.0
  %429 = vmatprep.subr.mxu0 0.0
  %430 = vmatpush2.msra.mxu0 0.0
  %431 = vmatprep.subr.mxu0 0.0
  %432 = vmatpush2.msra.mxu0 0.0
  %433 = vmatprep.subr.mxu0 0.0
  %434 = vmatpush2.msra.mxu0 0.0
  %435 = vmatprep.subr.mxu0 0.0
  %436 = vmatpush2.msra.mxu0 0.0
  %437 = vmatprep.subr.mxu0 0.0
  %438 = vmatpush2.msra.mxu0 0.0
  %439 = vmatprep.subr.mxu0 0.0
  %440 = vmatpush2.msra.mxu0 0.0
  %441 = vmatprep.subr.mxu0 0.0
  %442 = vmatpush2.msra.mxu0 0.0
  %443 = vmatprep.subr.mxu0 0.0
  %444 = vmatpush2.msra.mxu0 0.0
  %445 = vmatprep.subr.mxu0 0.0
  %446 = vmatpush2.msra.mxu0 0.0
  %447 = vmatprep.subr.mxu0 0.0
  %448 = vmatpush2.msra.mxu0 0.0
  %449 = vmatprep.subr.mxu0 0.0
  %450 = vmatpush2.msra.mxu0 0.0
  %451 = vmatprep.subr.mxu0 0.0
  %452 = vmatpush2.msra.mxu0 0.0
  %453 = vmatprep.subr.mxu0 0.0
  %454 = vmatpush2.msra.mxu0 0.0
  %455 = vmatprep.subr.mxu0 0.0
  %456 = vmatpush2.msra.mxu0 0.0
  %457 = vmatprep.mubr.f32.mxu0 0.0
  %458 = vmatmul.mubr.f32.gmra.mxu0 %v391
  %v459 = vpop.f32.mrf.mxu0
  %v460 = vadd.f32 %v385, %v459
  %v461 = vpop.f32.mrf.mxu0
  %462 = vdwg.mxu0
  %vm463 = vcmask 1024
  %464 = vst.msk [vmem:[%s8] sm:$0x3] %vm463, %v460
  // Predicated region
  $region34: #{tpu_custom_call.1} parent=0 // pred_check
    _
  $region35: #{tpu_custom_call.1} parent=0 // pred_check_branch
    %466 = sbr.rel (0) target = $region37
  $region36: #{tpu_custom_call.1} parent=0 // pred_region
    _
  $region37: #{tpu_custom_call.1} parent=0 // pred_fallthru
    _
  // Predicated region
  $region38: #{tpu_custom_call.1} parent=0 // pred_check
    _
  $region39: #{tpu_custom_call.1} parent=0 // pred_check_branch
    %468 = sbr.rel (0) target = $region41
  $region40: #{tpu_custom_call.1} parent=0 // pred_region
    _
  $region41: #{tpu_custom_call.1} parent=0 // pred_fallthru
    _

</llo_original>
